<compile_context>
chip_gen: v5e
topology: v5e:2x2
jax: 0.10.0
libtpu: 0.0.40
codegen_flags: <defaults>
</compile_context>

<pallas_src>
import functools

import jax
import jax.numpy as jnp
from jax import lax
from jax.experimental import pallas as pl
from jax.experimental.pallas import tpu as pltpu


def head_kernel(x_ref, w_ref, o_ref, *, scale, mxu_dtype):
    # x_ref: (1, T, C) block for batch b   (bf16 or f32, per mxu_dtype)
    # w_ref: (C, 3H)   fused [q | k | v] projection weights (same dtype)
    # o_ref: (1, T, H) output block for batch b
    _, T, H = o_ref.shape

    x = x_ref[0]          # (T, C)
    w = w_ref[...]        # (C, 3H)

    # Single fused projection matmul per grid step; f32 accumulation.
    qkv = jnp.dot(x, w, preferred_element_type=jnp.float32)        # (T, 3H) f32

    # Fold the 1/sqrt(C) scale into q (T*H muls instead of T*T), then hand the
    # MXU bf16 operands (f32 accumulate).  NB: module scales by n_embed (C),
    # not head_size.
    q = (qkv[:, 0:H] * jnp.float32(scale)).astype(mxu_dtype)        # (T, H)
    k = qkv[:, H:2 * H].astype(mxu_dtype)                           # (T, H)
    v = qkv[:, 2 * H:3 * H].astype(mxu_dtype)                       # (T, H)

    # q @ k^T contracting the last axes of both operands (no explicit transpose).
    wei = lax.dot_general(q, k, (((1,), (1,)), ((), ())),
                          preferred_element_type=jnp.float32)       # (T, T) f32

    # Causal mask.  Large finite negative instead of -inf: identical to the
    # reference under strict causal masking (no row is ever fully masked) and
    # NaN-safe if reused with padding/segment masks.
    row = lax.broadcasted_iota(jnp.int32, (T, T), 0)
    col = lax.broadcasted_iota(jnp.int32, (T, T), 1)
    wei = jnp.where(col <= row, wei, jnp.float32(-1e30))

    # Numerically stable softmax, all in f32 (v5e VPU/EUP have no bf16).
    m = jnp.max(wei, axis=-1, keepdims=True)
    p = jnp.exp(wei - m)
    denom = jnp.sum(p, axis=-1, keepdims=True)
    p = p / denom                      # exact divide (per correctness review)

    # TODO(synk): training-mode dropout on `p` would go here.

    out = jnp.dot(p.astype(mxu_dtype), v,
                  preferred_element_type=jnp.float32)                # (T, H)
    o_ref[0] = out.astype(o_ref.dtype)


def fuse_qkv_weights(wq, wk, wv):
    """Build the fused (C, 3H) projection weight ONCE, outside the call path."""
    return jnp.concatenate([wq, wk, wv], axis=1)


def head_forward(x, w_qkv, *, mxu_dtype=jnp.bfloat16):
    """x: (B, T, C); w_qkv: (C, 3H) pre-fused [q | k | v] weights.

    Returns (B, T, H) — same semantics as Head.forward (eval mode).
    `mxu_dtype=jnp.bfloat16` (default) feeds the MXU bf16 operands with f32
    accumulation (v5e/v6e/v7x native); pass jnp.float32 for exact parity.
    """
    B, T, C = x.shape
    H3 = w_qkv.shape[1]
    H = H3 // 3
    scale = float(C) ** -0.5

    x_m = x.astype(mxu_dtype)
    w_m = w_qkv.astype(mxu_dtype)

    kernel = functools.partial(head_kernel, scale=scale, mxu_dtype=mxu_dtype)

    return pl.pallas_call(
        kernel,
        out_shape=jax.ShapeDtypeStruct((B, T, H), x.dtype),
        grid=(B,),
        in_specs=[
            pl.BlockSpec((1, T, C), lambda b: (b, 0, 0)),   # per-batch x tile
            pl.BlockSpec((C, H3), lambda b: (0, 0)),        # weights, resident
        ],
        out_specs=pl.BlockSpec((1, T, H), lambda b: (b, 0, 0)),
        compiler_params=pltpu.CompilerParams(
            dimension_semantics=("parallel",)),              # megacore-shardable
    )(x_m, w_m)


def head_reference(x, wk, wq, wv):
    """Pure-JAX f32 reference mirroring the PyTorch forward (eval mode)."""
    B, T, C = x.shape
    k = x @ wk
    q = x @ wq
    v = x @ wv
    wei = jnp.einsum("btd,bsd->bts", q, k) * (C ** -0.5)
    mask = jnp.tril(jnp.ones((T, T), dtype=bool))
    wei = jnp.where(mask[None, :, :], wei, -jnp.inf)
    wei = jax.nn.softmax(wei, axis=-1)
    return wei @ v


if __name__ == "__main__":
    # Small deterministic config consistent with the module's forward:
    # B=2, T(seq)=8 (<= block_size), C(n_embed)=32, head_size=16.
    B, T, C, H = 2, 8, 32, 16

    key = jax.random.PRNGKey(0)
    kx, kk, kq, kv = jax.random.split(key, 4)

    x = jax.random.normal(kx, (B, T, C), dtype=jnp.float32)
    # deterministic "Linear(no bias)" weights, stored (C, H) so y = x @ W
    wk = jax.random.normal(kk, (C, H), dtype=jnp.float32) * (C ** -0.5)
    wq = jax.random.normal(kq, (C, H), dtype=jnp.float32) * (C ** -0.5)
    wv = jax.random.normal(kv, (C, H), dtype=jnp.float32) * (C ** -0.5)

    # Fused weight is a "parameter": built once, outside the per-call path.
    w_qkv = fuse_qkv_weights(wq, wk, wv)

    ref = head_reference(x, wk, wq, wv)

    # Default path: bf16 MXU operands, f32 accumulation / softmax.
    out = jax.block_until_ready(head_forward(x, w_qkv))
    assert out.shape == (B, T, H)
    # Tolerance reflects bf16 operand quantization (~0.2% per operand); the
    # measured error at these shapes is ~1e-2 absolute worst-case.
    assert jnp.allclose(out, ref, atol=5e-2, rtol=5e-2), "bf16 path mismatch vs reference"

    # Exact-parity path: f32 MXU operands + exact softmax divide.
    out_f32 = jax.block_until_ready(head_forward(x, w_qkv, mxu_dtype=jnp.float32))
    assert jnp.allclose(out_f32, ref, atol=2e-3, rtol=2e-3), "f32 path mismatch vs reference"

    print("KERNEL_OK")
</pallas_src>

<mosaic_0001>
module attributes {stable_mosaic.version = 11 : i64} {
  func.func @head_kernel(%arg0: i32, %arg1: memref<1x8x32xbf16, #tpu.memory_space<vmem>>, %arg2: memref<32x48xbf16, #tpu.memory_space<vmem>>, %arg3: memref<1x8x16xf32, #tpu.memory_space<vmem>>) attributes {dimension_semantics = [#tpu.dimension_semantics<parallel>], iteration_bounds = array<i64: 2>, scalar_prefetch = 0 : i64, scratch_operands = 0 : i64, tpu.core_type = #tpu.core_type<tc>, window_params = [{transform_indices = @transform_0, window_bounds = array<i64: 1, 8, 32>}, {pipeline_mode = #tpu.pipeline_mode<synchronous>, transform_indices = @transform_1, window_bounds = array<i64: 32, 48>}, {transform_indices = @transform_2, window_bounds = array<i64: 1, 8, 16>}]} {
    %c0 = arith.constant 0 : index
    %c0_0 = arith.constant 0 : index
    %c0_1 = arith.constant 0 : index
    %0 = vector.load %arg1[%c0, %c0_0, %c0_1] : memref<1x8x32xbf16, #tpu.memory_space<vmem>>, vector<1x8x32xbf16>
    %1 = vector.shape_cast %0 : vector<1x8x32xbf16> to vector<8x32xbf16>
    %c0_2 = arith.constant 0 : index
    %c0_3 = arith.constant 0 : index
    %2 = vector.load %arg2[%c0_2, %c0_3] : memref<32x48xbf16, #tpu.memory_space<vmem>>, vector<32x48xbf16>
    %cst = arith.constant dense<0.000000e+00> : vector<8x48xf32>
    %3 = tpu.matmul %1, %2, %cst {dimension_numbers = #tpu.dot_dimension_numbers<[1], [0], [0], [1], [0, 0, 1, 1], [], []>} : vector<8x32xbf16>, vector<32x48xbf16>, vector<8x48xf32> -> vector<8x48xf32>
    %4 = vector.extract_strided_slice %3 {offsets = [0, 0], sizes = [8, 16], strides = [1, 1]} : vector<8x48xf32> to vector<8x16xf32>
    %cst_4 = arith.constant 0.176776692 : f32
    %5 = vector.broadcast %cst_4 : f32 to vector<8x16xf32>
    %6 = arith.mulf %4, %5 : vector<8x16xf32>
    %7 = arith.truncf %6 : vector<8x16xf32> to vector<8x16xbf16>
    %8 = vector.extract_strided_slice %3 {offsets = [0, 16], sizes = [8, 16], strides = [1, 1]} : vector<8x48xf32> to vector<8x16xf32>
    %9 = arith.truncf %8 : vector<8x16xf32> to vector<8x16xbf16>
    %10 = vector.extract_strided_slice %3 {offsets = [0, 32], sizes = [8, 16], strides = [1, 1]} : vector<8x48xf32> to vector<8x16xf32>
    %11 = arith.truncf %10 : vector<8x16xf32> to vector<8x16xbf16>
    %cst_5 = arith.constant dense<0.000000e+00> : vector<8x8xf32>
    %12 = tpu.matmul %7, %9, %cst_5 {dimension_numbers = #tpu.dot_dimension_numbers<[1], [1], [0], [0], [0, 0, 1, 0], [], []>} : vector<8x16xbf16>, vector<8x16xbf16>, vector<8x8xf32> -> vector<8x8xf32>
    %13 = tpu.iota {dimensions = array<i32: 0>} : vector<8x8xi32>
    %14 = tpu.iota {dimensions = array<i32: 1>} : vector<8x8xi32>
    %15 = arith.cmpi sle, %14, %13 : vector<8x8xi32>
    %cst_6 = arith.constant -1.000000e+30 : f32
    %16 = vector.broadcast %cst_6 : f32 to vector<8x8xf32>
    %17 = arith.select %15, %12, %16 : vector<8x8xi1>, vector<8x8xf32>
    %cst_7 = arith.constant dense<0xFF800000> : vector<8xf32>
    %18 = vector.multi_reduction <maximumf>, %17, %cst_7 [1] : vector<8x8xf32> to vector<8xf32>
    %19 = vector.shape_cast %18 : vector<8xf32> to vector<8x1xf32>
    %20 = vector.broadcast %19 : vector<8x1xf32> to vector<8x8xf32>
    %21 = arith.subf %17, %20 : vector<8x8xf32>
    %22 = math.exp %21 : vector<8x8xf32>
    %cst_8 = arith.constant dense<0.000000e+00> : vector<8xf32>
    %23 = vector.multi_reduction <add>, %22, %cst_8 [1] : vector<8x8xf32> to vector<8xf32>
    %24 = vector.shape_cast %23 : vector<8xf32> to vector<8x1xf32>
    %25 = vector.broadcast %24 : vector<8x1xf32> to vector<8x8xf32>
    %26 = arith.divf %22, %25 : vector<8x8xf32>
    %27 = arith.truncf %26 : vector<8x8xf32> to vector<8x8xbf16>
    %cst_9 = arith.constant dense<0.000000e+00> : vector<8x16xf32>
    %28 = tpu.matmul %27, %11, %cst_9 {dimension_numbers = #tpu.dot_dimension_numbers<[1], [0], [0], [1], [0, 0, 1, 1], [], []>} : vector<8x8xbf16>, vector<8x16xbf16>, vector<8x16xf32> -> vector<8x16xf32>
    %c0_10 = arith.constant 0 : index
    %c0_11 = arith.constant 0 : index
    %c0_12 = arith.constant 0 : index
    %29 = vector.load %arg3[%c0_10, %c0_11, %c0_12] : memref<1x8x16xf32, #tpu.memory_space<vmem>>, vector<1x8x16xf32>
    %30 = vector.shape_cast %29 : vector<1x8x16xf32> to vector<8x16xf32>
    %31 = vector.shape_cast %28 : vector<8x16xf32> to vector<1x8x16xf32>
    tpu.vector_store %arg3[%c0_10, %c0_11, %c0_12], %31 {strides = array<i32>} : memref<1x8x16xf32, #tpu.memory_space<vmem>>, vector<1x8x16xf32>,
    return
  }
  func.func @transform_0(%arg0: i32) -> (i32, i32, i32) {
    %c0_i32 = arith.constant 0 : i32
    %c0_i32_0 = arith.constant 0 : i32
    %c0_i32_1 = arith.constant 0 : i32
    return %arg0, %c0_i32, %c0_i32_0 : i32, i32, i32
  }
  func.func @transform_1(%arg0: i32) -> (i32, i32) {
    %c0_i32 = arith.constant 0 : i32
    %c0_i32_0 = arith.constant 0 : i32
    %c0_i32_1 = arith.constant 0 : i32
    return %c0_i32, %c0_i32_0 : i32, i32
  }
  func.func @transform_2(%arg0: i32) -> (i32, i32, i32) {
    %c0_i32 = arith.constant 0 : i32
    %c0_i32_0 = arith.constant 0 : i32
    %c0_i32_1 = arith.constant 0 : i32
    return %arg0, %c0_i32, %c0_i32_0 : i32, i32, i32
  }
}

</mosaic_0001>

<llo_original>
// kernel: tpu_custom_call.1
$region0: #{tpu_custom_call.1}
  #allocation0 [shape = 'u32[]', space=smem, size = 0x4, offset = 0x4, fixed_abs, tag = 'smem constant byte address 0x4 - core index']
  #allocation1 [shape = 'u32[72,128]{1,0:T(1,128)}', space=vmem, size = 0x9000, scoped, tag = 'internal scratch']
  %s0 = inlined_call_operand.hbm [shape: bf16[2,8,32], index: 0, kind: input, shape index: {}]
  %s1 = inlined_call_operand.hbm [shape: bf16[32,48], index: 1, kind: input, shape index: {}]
  %s2 = inlined_call_operand.hbm [shape: f32[2,8,16], index: 2, kind: output, shape index: {}]
  %s3 = sld [smem:[#allocation0]]
  $region49: #{tpu_custom_call.1} parent=0
    _
  %s5 = ssub.s32 1, %s3
  %s6 = scalar_select 0, %s5, %s3
  $region1: #{tpu_custom_call.1} parent=0
    #allocation2 [shape = 'u8[4096]{0}', space=vmem, size = 0x1000, scoped, tag = 'input window, operand 0']
    #allocation3 [shape = 's32[2]{0}', space=sflag, size = 0x8, scoped, tag = 'scoped memory for tpu_custom_call.1']
    #allocation4 [shape = 's32[2]{0}', space=sflag, size = 0x8, scoped, tag = 'scoped memory for tpu_custom_call.1']
    #allocation5 [shape = 'u8[8192]{0}', space=vmem, size = 0x2000, scoped, tag = 'input window, operand 1, single buffered']
    #allocation6 [shape = 's32[1]{0}', space=sflag, size = 0x4, scoped, tag = 'scoped memory for tpu_custom_call.1']
    #allocation7 [shape = 'u8[8192]{0}', space=vmem, size = 0x2000, scoped, tag = 'output window, operand 0']
    %7 = vsyncpa [#allocation3], 0
    %s8 = scalar_lea.sflag [#allocation3], 1
    %9 = vsyncpa %s8, 0
    %10 = vsyncpa [#allocation6], 0
    %11 = vsyncpa [#allocation4], 0
    %s12 = scalar_lea.sflag [#allocation4], 1
    %13 = vsyncpa %s12, 0
    loop: start=0, step=1, limit=4
    $region2: #{tpu_custom_call.1} parent=1 // loop_pre_header
      _
    $region3: #{tpu_custom_call.1} parent=1 // loop_header
      %s15 = sphi 0, %s19
      %p16 = scmp.ge.s32.totalorder %s15, 4
      %s25 = sphi 0, %s27
      %s28 = sphi 0, %s25
      %s29 = sphi 0, %s28
      %s45 = sphi 0, %s29
      %s49 = sphi 0, %s49
      %s51 = sphi 0, %s49
      %s52 = sphi 0, %s51
      %s66 = sphi 0, %s52
      %s72 = sphi 0, %s74
      %s75 = sphi 0, %s72
      %s76 = sphi 0, %s75
      %s92 = sphi 0, %s76
    $region4: #{tpu_custom_call.1} parent=1 // loop_header_branch
      %18 = sbr.rel (%p16) target = $region8
    $region5: #{tpu_custom_call.1} parent=1 // loop_body
      %s20 = ssub.s32 %s15, 1
      %s21 = ssub.s32 %s15, 2
      %s22 = sadd.s32 %s15, 1
      %s23 = ssub.s32 %s15, %s22
      %p24 = scmp.eq.s32.totalorder %s23, 0
      %s26 = sadd.s32 %s25, 1
      %s27 = scalar_select %p24, %s25, %s26
      %p30 = pneg %p24
      %p31 = scmp.eq.s32.totalorder %s15, 1
      %p32 = por %p30, %p31
      %p33 = scmp.ne.s32.totalorder %s25, %s28
      %p34 = scmp.eq.s32.totalorder %s15, 0
      %p35 = por %p33, %p34
      %p36 = scmp.ne.s32.totalorder %s25, %s28
      %p37 = scmp.eq.s32.totalorder %s20, 1
      %p38 = por %p36, %p37
      %p39 = scmp.ne.s32.totalorder %s28, %s29
      %p40 = scmp.eq.s32.totalorder %s20, 0
      %p41 = por %p39, %p40
      %p42 = scmp.ne.s32.totalorder %s28, %s29
      %p43 = scmp.eq.s32.totalorder %s21, 1
      %p44 = por %p42, %p43
      %p46 = scmp.ne.s32.totalorder %s29, %s45
      %p47 = scmp.eq.s32.totalorder %s21, 0
      %p48 = por %p46, %p47
      %s50 = sadd.s32 %s49, 1
      %p53 = scmp.eq.s32.totalorder %s15, 1
      %p54 = scmp.ne.s32.totalorder %s49, %s51
      %p55 = scmp.eq.s32.totalorder %s15, 0
      %p56 = por %p54, %p55
      %p57 = scmp.ne.s32.totalorder %s49, %s51
      %p58 = scmp.eq.s32.totalorder %s20, 1
      %p59 = por %p57, %p58
      %p60 = scmp.ne.s32.totalorder %s51, %s52
      %p61 = scmp.eq.s32.totalorder %s20, 0
      %p62 = por %p60, %p61
      %p63 = scmp.ne.s32.totalorder %s51, %s52
      %p64 = scmp.eq.s32.totalorder %s21, 1
      %p65 = por %p63, %p64
      %p67 = scmp.ne.s32.totalorder %s52, %s66
      %p68 = scmp.eq.s32.totalorder %s21, 0
      %p69 = por %p67, %p68
      %s70 = ssub.s32 %s15, %s22
      %p71 = scmp.eq.s32.totalorder %s70, 0
      %s73 = sadd.s32 %s72, 1
      %s74 = scalar_select %p71, %s72, %s73
      %p77 = pneg %p71
      %p78 = scmp.eq.s32.totalorder %s15, 1
      %p79 = por %p77, %p78
      %p80 = scmp.ne.s32.totalorder %s72, %s75
      %p81 = scmp.eq.s32.totalorder %s15, 0
      %p82 = por %p80, %p81
      %p83 = scmp.ne.s32.totalorder %s72, %s75
      %p84 = scmp.eq.s32.totalorder %s20, 1
      %p85 = por %p83, %p84
      %p86 = scmp.ne.s32.totalorder %s75, %s76
      %p87 = scmp.eq.s32.totalorder %s20, 0
      %p88 = por %p86, %p87
      %p89 = scmp.ne.s32.totalorder %s75, %s76
      %p90 = scmp.eq.s32.totalorder %s21, 1
      %p91 = por %p89, %p90
      %p93 = scmp.ne.s32.totalorder %s76, %s92
      %p94 = scmp.eq.s32.totalorder %s21, 0
      %p95 = por %p93, %p94
      %p96 = scmp.le.s32.totalorder 1, %s15
      %p97 = scmp.lt.s32.totalorder %s15, 3
      %p98 = pnand %p96, %p97
      %p99 = pneg %p98
      // Predicated region
      $region9: #{tpu_custom_call.1} parent=5 // pred_check
        _
      $region10: #{tpu_custom_call.1} parent=5 // pred_check_branch
        %101 = sbr.rel (%p98) target = $region12
      $region11: #{tpu_custom_call.1} parent=5 // pred_region
        %s102 = ssub.s32 %s15, 1
        // Predicated region
        $region13: #{tpu_custom_call.1} parent=11 // pred_check
          %p103 = pneg %p62
        $region14: #{tpu_custom_call.1} parent=11 // pred_check_branch
          %105 = sbr.rel (%p103) target = $region16
        $region15: #{tpu_custom_call.1} parent=11 // pred_region
          %107 = vsyncadd [#allocation6], 0
          %s108 = sshll.u32 %s1, 4
          %s109 = int_to_ptr.hbm [resolvable:$true] %s108
          %s110 = sshll.u32 [#allocation5], 4
          %s111 = int_to_ptr.vmem [resolvable:$true] %s110
          %116 = dma.hbm_to_vmem [thread:$0]  %s109, 256, %s111, [#allocation6], 64, 64, 4
        $region16: #{tpu_custom_call.1} parent=11 // pred_fallthru
          _
      $region12: #{tpu_custom_call.1} parent=5 // pred_fallthru
        _
      %p117 = scmp.lt.s32.totalorder %s15, 2
      // Predicated region
      $region17: #{tpu_custom_call.1} parent=5 // pred_check
        %p118 = pneg %p117
      $region18: #{tpu_custom_call.1} parent=5 // pred_check_branch
        %120 = sbr.rel (%p118) target = $region20
      $region19: #{tpu_custom_call.1} parent=5 // pred_region
        // Predicated region
        $region21: #{tpu_custom_call.1} parent=19 // pred_check
          %p121 = pneg %p35
        $region22: #{tpu_custom_call.1} parent=19 // pred_check_branch
          %123 = sbr.rel (%p121) target = $region24
        $region23: #{tpu_custom_call.1} parent=19 // pred_region
          %s124 = sand.u32 %s25, 1
          %s125 = scalar_lea.sflag [#allocation3], %s124
          %s126 = sand.u32 %s25, 1
          %s127 = smul.addr %s126, 4
          %s128 = scalar_lea.vmem [#allocation2], %s127
          %130 = vsyncadd %s125, 0
          %s131 = smul.addr %s15, 4
          %s132 = scalar_lea.hbm %s0, %s131
          %s134 = sshll.u32 %s132, 4
          %s135 = int_to_ptr.hbm [resolvable:$true] %s134
          %s136 = sshll.u32 %s128, 4
          %s137 = int_to_ptr.vmem [resolvable:$true] %s136
          %139 = dma.hbm_to_vmem [thread:$0]  %s135, 64, %s137, %s125
        $region24: #{tpu_custom_call.1} parent=19 // pred_fallthru
          _
      $region20: #{tpu_custom_call.1} parent=5 // pred_fallthru
        _
      %p140 = scmp.le.s32.totalorder 1, %s15
      %p141 = scmp.lt.s32.totalorder %s15, 3
      %p142 = pnand %p140, %p141
      %p143 = pneg %p142
      // Predicated region
      $region25: #{tpu_custom_call.1} parent=5 // pred_check
        _
      $region26: #{tpu_custom_call.1} parent=5 // pred_check_branch
        %145 = sbr.rel (%p142) target = $region28
      $region27: #{tpu_custom_call.1} parent=5 // pred_region
        %s146 = ssub.s32 %s15, 1
        %s147 = sand.u32 %s28, 1
        %s148 = scalar_lea.sflag [#allocation3], %s147
        %s149 = sand.u32 %s28, 1
        %s150 = smul.addr %s149, 4
        %s151 = scalar_lea.vmem [#allocation2], %s150
        // Predicated region
        $region29: #{tpu_custom_call.1} parent=27 // pred_check
          %p152 = pneg %p41
        $region30: #{tpu_custom_call.1} parent=27 // pred_check_branch
          %154 = sbr.rel (%p152) target = $region32
        $region31: #{tpu_custom_call.1} parent=27 // pred_region
          %156 = dma.done %s148, 64
        $region32: #{tpu_custom_call.1} parent=27 // pred_fallthru
          _
        // Predicated region
        $region33: #{tpu_custom_call.1} parent=27 // pred_check
          %p157 = pneg %p62
        $region34: #{tpu_custom_call.1} parent=27 // pred_check_branch
          %159 = sbr.rel (%p157) target = $region36
        $region35: #{tpu_custom_call.1} parent=27 // pred_region
          %161 = dma.done [#allocation6], 256
        $region36: #{tpu_custom_call.1} parent=27 // pred_fallthru
          _
        %s162 = sand.u32 %s28, 1
        %s163 = scalar_lea.sflag [#allocation3], %s162
        %s164 = sand.u32 %s28, 1
        %s165 = smul.addr %s164, 4
        %s166 = scalar_lea.vmem [#allocation2], %s165
        %p167 = pneg %p41
        %p168 = pneg %p38
        %p169 = pneg %p62
        %p170 = pneg %p59
        %p171 = pneg %p88
        %p172 = pneg %p85
        %s173 = sand.u32 %s75, 1
        %s174 = scalar_lea.sflag [#allocation4], %s173
        %s175 = sand.u32 %s75, 1
        %s176 = smul.addr %s175, 8
        %s177 = scalar_lea.vmem [#allocation7], %s176
        %v179 = vld [vmem:[%s151] sm:$0xf]
        %v180 = vld [vmem:[#allocation5] sm:$0xf]
        %v181 = vld [vmem:[#allocation5 + $0x4] sm:$0xf]
        %v182 = vld [vmem:[#allocation5 + $0x8] sm:$0xf]
        %v183 = vld [vmem:[#allocation5 + $0xc] sm:$0xf]
        %v188 = vunpack.c.l.b16 %v180
        %v189 = vunpack.c.l.b16 %v181
        %v190 = vunpack.c.l.b16 %v182
        %v191 = vunpack.c.l.b16 %v183
        %v192 = vpack.c.b16 %v189, %v188
        %v193 = vpack.c.b16 %v191, %v190
        %vm196 = vcmask 261120
        %v198 = vsel %vm196, %v179, 0
        %200 = vmatpush.bf16.msra.mxu0 0
        %201 = vmatpush.bf16.msra.mxu0 0
        %202 = vmatpush.bf16.msra.mxu0 0
        %203 = vmatpush.bf16.msra.mxu0 0
        %204 = vmatpush.bf16.msra.mxu0 0
        %205 = vmatpush.bf16.msra.mxu0 0
        %206 = vmatpush.bf16.msra.mxu0 %v193
        %207 = vmatpush.bf16.msra.mxu0 %v192
        %208 = vmatmul.bf16.gmra.mxu0 %v198
        %v209 = vpop.f32.mrf.mxu0
        %v210 = vadd.f32 0.0, %v209
        %v211 = vpop.f32.mrf.mxu0
        %212 = vdwg.mxu0
        %v213 = vmul.f32 %v210, 0.17677669
        %v214 = vpack.c.bf16 %v213, %v213
        %v215 = vpack.c.bf16 %v210, %v210
        %217 = vrot.lane.b32.xlu0 %v215, 112
        %v218 = vpop.permute.xlu0 %217
        %vm219 = vcmask 130048
        %v221 = vsel %vm219, %v214, 0
        %v224 = vsel %vm219, %v218, 0
        %226 = vmatpush.bf16.xpose.msra.mxu0 0
        %227 = vmatpush.bf16.xpose.msra.mxu0 0
        %228 = vmatpush.bf16.xpose.msra.mxu0 0
        %229 = vmatpush.bf16.xpose.msra.mxu0 0
        %230 = vmatpush.bf16.xpose.msra.mxu0 0
        %231 = vmatpush.bf16.xpose.msra.mxu0 0
        %232 = vmatpush.bf16.xpose.msra.mxu0 0
        %233 = vmatpush.bf16.xpose.msra.mxu0 %v224
        %234 = vmatmul.bf16.gmra.mxu0 %v221
        %v235 = vpop.f32.mrf.mxu0
        %v236 = vadd.f32 0.0, %v235
        %v237 = vpop.f32.mrf.mxu0
        %238 = vdwg.mxu0
        %v239 = vlaneseq
        %v240 = vshrl.u32 %v239, 7
        %v241 = vlaneseq
        %v242 = vand.u32 %v241, 127
        %vm243 = vcmp.le.s32.totalorder %v242, %v240
        %v244 = vsel %vm243, %v236, -1e+30
        %vm245 = vcmask 64512
        %v246 = vsel %vm245, %v244, -inf
        %247 = vmax.xlane.f32.xlu0 %v246
        %v248 = vpop.xlane.xlu0 %247
        %v249 = vsub.f32 %v244, %v248
        %v250 = vmul.f32 %v249, 1.442695
        %v251 = vpow.pop %v250
        %v252 = vsel %vm245, %v251, 0.0
        %253 = vadd.xlane.f32.xlu0 %v252
        %v254 = vpop.xlane.xlu0 %253
        %v255 = vrcp.pop %v254
        %v256 = vmul.f32 %v254, %v255
        %v257 = vsub.f32 1.0, %v256
        %v258 = vmul.f32 %v255, %v257
        %v259 = vadd.f32 %v255, %v258
        %vm260 = vweird.f32 %v254
        %vm261 = vweird.f32 %v255
        %vm262 = vmor %vm260, %vm261
        %v263 = vsel %vm262, %v255, %v259
        %v264 = vand.u32 2147483647, %v254
        %vm265 = vcmp.eq.f32.partialorder %v264, 8.507059e+37
        %v266 = vand.u32 %v254, 2147483648
        %v267 = vor.u32 1.1754944e-38, %v266
        %v268 = vsel %vm265, %v267, %v263
        %v269 = vmul.f32 %v251, %v268
        %v270 = vpack.c.bf16 %v269, %v269
        %271 = vrot.lane.b32.xlu0 %v215, 96
        %v272 = vpop.permute.xlu0 %271
        %v274 = vsel %vm245, %v270, 0
        %vm276 = vcmask 1043456
        %v278 = vsel %vm276, %v272, 0
        %280 = vmatpush.bf16.msra.mxu0 0
        %281 = vmatpush.bf16.msra.mxu0 0
        %282 = vmatpush.bf16.msra.mxu0 0
        %283 = vmatpush.bf16.msra.mxu0 0
        %284 = vmatpush.bf16.msra.mxu0 0
        %285 = vmatpush.bf16.msra.mxu0 0
        %286 = vmatpush.bf16.msra.mxu0 0
        %287 = vmatpush.bf16.msra.mxu0 %v278
        %288 = vmatmul.bf16.gmra.mxu0 %v274
        %v289 = vpop.f32.mrf.mxu0
        %v290 = vadd.f32 0.0, %v289
        %v291 = vpop.f32.mrf.mxu0
        %292 = vdwg.mxu0
        %293 = vst.msk [vmem:[%s177] sm:$0xff] %vm219, %v290
        %s294 = sand.u32 %s75, 1
        %s295 = scalar_lea.sflag [#allocation4], %s294
        %s296 = sand.u32 %s75, 1
        %s297 = smul.addr %s296, 8
        %s298 = scalar_lea.vmem [#allocation7], %s297
        // Predicated region
        $region37: #{tpu_custom_call.1} parent=27 // pred_check
          %p299 = pneg %p85
        $region38: #{tpu_custom_call.1} parent=27 // pred_check_branch
          %301 = sbr.rel (%p299) target = $region40
        $region39: #{tpu_custom_call.1} parent=27 // pred_region
          %303 = vsyncadd %s295, 0
          %s304 = smul.addr %s20, 8
          %s305 = scalar_lea.hbm %s2, %s304
          %s307 = sshll.u32 %s298, 4
          %s308 = int_to_ptr.vmem [resolvable:$true] %s307
          %s309 = sshll.u32 %s305, 4
          %s310 = int_to_ptr.hbm [resolvable:$true] %s309
          %312 = dma.vmem_to_hbm [thread:$0]  %s308, 128, %s310, %s295
        $region40: #{tpu_custom_call.1} parent=27 // pred_fallthru
          _
      $region28: #{tpu_custom_call.1} parent=5 // pred_fallthru
        _
      %p313 = scmp.le.s32.totalorder 2, %s15
      // Predicated region
      $region41: #{tpu_custom_call.1} parent=5 // pred_check
        %p314 = pneg %p313
      $region42: #{tpu_custom_call.1} parent=5 // pred_check_branch
        %316 = sbr.rel (%p314) target = $region44
      $region43: #{tpu_custom_call.1} parent=5 // pred_region
        %s317 = ssub.s32 %s15, 2
        // Predicated region
        $region45: #{tpu_custom_call.1} parent=43 // pred_check
          %p318 = pneg %p91
        $region46: #{tpu_custom_call.1} parent=43 // pred_check_branch
          %320 = sbr.rel (%p318) target = $region48
        $region47: #{tpu_custom_call.1} parent=43 // pred_region
          %s321 = sand.u32 %s76, 1
          %s322 = scalar_lea.sflag [#allocation4], %s321
          %s323 = sand.u32 %s76, 1
          %s324 = smul.addr %s323, 8
          %s325 = scalar_lea.vmem [#allocation7], %s324
          %327 = dma.done %s322, 128
        $region48: #{tpu_custom_call.1} parent=43 // pred_fallthru
          _
      $region44: #{tpu_custom_call.1} parent=5 // pred_fallthru
        _
    $region6: #{tpu_custom_call.1} parent=1 // loop_footer
      %s19 = sadd.s32 1, %s15
    $region7: #{tpu_custom_call.1} parent=1 // loop_footer_branch
      %14 = sbr.rel target = $region3
    $region8: #{tpu_custom_call.1} parent=1 // loop_exit
      _
    %328 = vsyncpa [#allocation3], 1
    %s329 = scalar_lea.sflag [#allocation3], 1
    %330 = vsyncpa %s329, 1
    %331 = vsyncpa [#allocation6], 1
    %332 = vsyncpa [#allocation4], 1
    %s333 = scalar_lea.sflag [#allocation4], 1
    %334 = vsyncpa %s333, 1

</llo_original>
